<compile_context>
chip_gen: v5e
topology: v5e:2x2
jax: 0.10.0
libtpu: 0.0.40
codegen_flags: <defaults>
</compile_context>

<pallas_src>
import jax
import jax.numpy as jnp
from jax.experimental import pallas as pl
from jax.experimental.pallas import tpu as pltpu

_LANE = 128
_SUBLANE = 8
_NEG_BIG = -1e30  # effectively -inf for the padded softmax columns (exp underflows to 0)


def _round_up(n, m):
    return ((n + m - 1) // m) * m


def classifier_kernel(x_ref, w1_ref, b1_ref, w2_ref, b2_ref, o_ref):
    # ---- hidden layer: Linear(x_dim -> h_dim) + softplus --------------------
    # MXU matmul with native-dtype operands (bf16 if inputs are bf16), f32 accumulation.
    h = jnp.dot(x_ref[...], w1_ref[...], preferred_element_type=jnp.float32)
    h = h + b1_ref[...].astype(jnp.float32)
    # numerically-stable softplus (matches F.softplus): max(h,0) + log1p(exp(-|h|))
    h = jnp.maximum(h, 0.0) + jnp.log1p(jnp.exp(-jnp.abs(h)))

    # ---- output layer: Linear(h_dim -> y_dim_padded) + softmax(dim=-1) -------
    z = jnp.dot(h.astype(w2_ref.dtype), w2_ref[...], preferred_element_type=jnp.float32)
    z = z + b2_ref[...].astype(jnp.float32)
    z = z - jnp.max(z, axis=-1, keepdims=True)
    e = jnp.exp(z)
    inv = pl.reciprocal(jnp.sum(e, axis=-1, keepdims=True), approx=False)
    o_ref[...] = (e * inv).astype(o_ref.dtype)


def classifier_forward(x, w1, b1, w2, b2, *, block_b=None):
    """softmax(softplus(x @ w1 + b1) @ w2 + b2, axis=-1)

    x:  [B, x_dim]
    w1: [x_dim, h_dim], b1: [1, h_dim]   (transposed vs. PyTorch nn.Linear weights)
    w2: [h_dim, y_dim], b2: [1, y_dim]
    """
    B, x_dim = x.shape
    h_dim = w1.shape[1]
    y_dim = w2.shape[1]
    out_dtype = x.dtype

    # ---- batch tiling: fixed row tile so the grid has many steps and Pallas can
    # software-pipeline the streamed x / out tiles; keep >= 2 grid steps when the
    # batch allows so both TensorCores are fed on v7x.
    if block_b is None:
        block_b = 512
    block_b = min(block_b, max(_SUBLANE, _round_up(pl.cdiv(B, 2), _SUBLANE)))
    block_b = max(_SUBLANE, _round_up(block_b, _SUBLANE))
    b_pad = _round_up(B, block_b)
    grid = (b_pad // block_b,)

    if b_pad != B:
        x = jnp.pad(x, ((0, b_pad - B), (0, 0)))  # zero rows, sliced off below

    # ---- lane-dense output: pad the class axis to a multiple of 128 so the
    # writeback is full unmasked vector stores. Padded logits get a huge negative
    # bias so they contribute exp() == 0 to the softmax denominator.
    y_pad = _round_up(max(y_dim, _LANE), _LANE)
    if y_pad != y_dim:
        w2 = jnp.pad(w2, ((0, 0), (0, y_pad - y_dim)))
        b2 = jnp.pad(b2, ((0, 0), (0, y_pad - y_dim)), constant_values=_NEG_BIG)

    out = pl.pallas_call(
        classifier_kernel,
        out_shape=jax.ShapeDtypeStruct((b_pad, y_pad), out_dtype),
        grid_spec=pltpu.PrefetchScalarGridSpec(
            num_scalar_prefetch=0,
            grid=grid,
            in_specs=[
                pl.BlockSpec((block_b, x_dim), lambda i: (i, 0)),  # streamed x tile
                pl.BlockSpec((x_dim, h_dim), lambda i: (0, 0)),    # W1 (VMEM-resident)
                pl.BlockSpec((1, h_dim), lambda i: (0, 0)),        # b1 (resident)
                pl.BlockSpec((h_dim, y_pad), lambda i: (0, 0)),    # W2 (resident)
                pl.BlockSpec((1, y_pad), lambda i: (0, 0)),        # b2 (resident)
            ],
            out_specs=pl.BlockSpec((block_b, y_pad), lambda i: (i, 0)),
        ),
        compiler_params=pltpu.CompilerParams(
            dimension_semantics=("parallel",),          # batch axis: megacore-shardable
            vmem_limit_bytes=48 * 1024 * 1024,          # safe on v5e/v6e/v7x
        ),
    )(x, w1, b1, w2, b2)

    return out[:B, :y_dim]


def init_params(key, x_dim, h_dim, y_dim, dtype=jnp.float32):
    """Deterministic init mimicking nn.Linear's default (uniform in +-1/sqrt(fan_in)),
    stored as [in, out] (transposed vs. PyTorch's [out, in])."""
    k1, k2, k3, k4 = jax.random.split(key, 4)
    lim1 = 1.0 / (x_dim ** 0.5)
    lim2 = 1.0 / (h_dim ** 0.5)
    w1 = jax.random.uniform(k1, (x_dim, h_dim), dtype, -lim1, lim1)
    b1 = jax.random.uniform(k2, (1, h_dim), dtype, -lim1, lim1)
    w2 = jax.random.uniform(k3, (h_dim, y_dim), dtype, -lim2, lim2)
    b2 = jax.random.uniform(k4, (1, y_dim), dtype, -lim2, lim2)
    return w1, b1, w2, b2


def reference_forward(x, w1, b1, w2, b2):
    h = jax.nn.softplus(x @ w1 + b1)
    return jax.nn.softmax(h @ w2 + b2, axis=-1)


if __name__ == "__main__":
    # dims = [x_dim, h_dim, y_dim]
    B, x_dim, h_dim, y_dim = 8, 32, 64, 16

    key = jax.random.PRNGKey(0)
    kx, kp = jax.random.split(key)
    x = jax.random.normal(kx, (B, x_dim), jnp.float32)
    w1, b1, w2, b2 = init_params(kp, x_dim, h_dim, y_dim)

    # f32 path (tight tolerance vs. pure-JAX reference)
    out = jax.block_until_ready(classifier_forward(x, w1, b1, w2, b2))
    ref = reference_forward(x, w1, b1, w2, b2)
    assert out.shape == (B, y_dim)
    assert jnp.allclose(jnp.sum(out, axis=-1), 1.0, atol=1e-5)
    assert jnp.allclose(out, ref, atol=1e-5, rtol=1e-5)

    # exercise the cdiv / batch-padding path with a batch that is not a divisor multiple
    B2 = 200
    x2 = jax.random.normal(jax.random.PRNGKey(1), (B2, x_dim), jnp.float32)
    out2 = jax.block_until_ready(classifier_forward(x2, w1, b1, w2, b2))
    ref2 = reference_forward(x2, w1, b1, w2, b2)
    assert out2.shape == (B2, y_dim)
    assert jnp.allclose(out2, ref2, atol=1e-5, rtol=1e-5)

    # bf16 streaming path: bf16 MXU operands with f32 accumulation + f32 activations
    xb = x.astype(jnp.bfloat16)
    w1b, b1b, w2b, b2b = (a.astype(jnp.bfloat16) for a in (w1, b1, w2, b2))
    outb = jax.block_until_ready(classifier_forward(xb, w1b, b1b, w2b, b2b))
    assert outb.shape == (B, y_dim)
    assert jnp.allclose(jnp.sum(outb.astype(jnp.float32), axis=-1), 1.0, atol=5e-2)
    assert jnp.allclose(outb.astype(jnp.float32), ref, atol=5e-2)

    print("KERNEL_OK")
</pallas_src>

<mosaic_0001>
module attributes {stable_mosaic.version = 11 : i64} {
  func.func @classifier_kernel(%arg0: i32, %arg1: memref<8x32xf32, #tpu.memory_space<vmem>>, %arg2: memref<32x64xf32, #tpu.memory_space<vmem>>, %arg3: memref<1x64xf32, #tpu.memory_space<vmem>>, %arg4: memref<64x128xf32, #tpu.memory_space<vmem>>, %arg5: memref<1x128xf32, #tpu.memory_space<vmem>>, %arg6: memref<8x128xf32, #tpu.memory_space<vmem>>) attributes {dimension_semantics = [#tpu.dimension_semantics<parallel>], iteration_bounds = array<i64: 1>, scalar_prefetch = 0 : i64, scratch_operands = 0 : i64, tpu.core_type = #tpu.core_type<tc>, window_params = [{transform_indices = @transform_0, window_bounds = array<i64: 8, 32>}, {pipeline_mode = #tpu.pipeline_mode<synchronous>, transform_indices = @transform_1, window_bounds = array<i64: 32, 64>}, {pipeline_mode = #tpu.pipeline_mode<synchronous>, transform_indices = @transform_2, window_bounds = array<i64: 1, 64>}, {pipeline_mode = #tpu.pipeline_mode<synchronous>, transform_indices = @transform_3, window_bounds = array<i64: 64, 128>}, {pipeline_mode = #tpu.pipeline_mode<synchronous>, transform_indices = @transform_4, window_bounds = array<i64: 1, 128>}, {transform_indices = @transform_5, window_bounds = array<i64: 8, 128>}]} {
    %c0 = arith.constant 0 : index
    %c0_0 = arith.constant 0 : index
    %0 = vector.load %arg1[%c0, %c0_0] : memref<8x32xf32, #tpu.memory_space<vmem>>, vector<8x32xf32>
    %c0_1 = arith.constant 0 : index
    %c0_2 = arith.constant 0 : index
    %1 = vector.load %arg2[%c0_1, %c0_2] : memref<32x64xf32, #tpu.memory_space<vmem>>, vector<32x64xf32>
    %cst = arith.constant dense<0.000000e+00> : vector<8x64xf32>
    %2 = tpu.matmul %0, %1, %cst {dimension_numbers = #tpu.dot_dimension_numbers<[1], [0], [0], [1], [0, 0, 1, 1], [], []>} : vector<8x32xf32>, vector<32x64xf32>, vector<8x64xf32> -> vector<8x64xf32>
    %c0_3 = arith.constant 0 : index
    %c0_4 = arith.constant 0 : index
    %3 = vector.load %arg3[%c0_3, %c0_4] : memref<1x64xf32, #tpu.memory_space<vmem>>, vector<1x64xf32>
    %4 = vector.broadcast %3 : vector<1x64xf32> to vector<8x64xf32>
    %5 = arith.addf %2, %4 : vector<8x64xf32>
    %cst_5 = arith.constant 0.000000e+00 : f32
    %6 = vector.broadcast %cst_5 : f32 to vector<8x64xf32>
    %7 = arith.maximumf %5, %6 : vector<8x64xf32>
    %8 = math.absf %5 : vector<8x64xf32>
    %cst_6 = arith.constant 0.000000e+00 : f32
    %9 = vector.broadcast %cst_6 : f32 to vector<8x64xf32>
    %10 = arith.subf %9, %8 : vector<8x64xf32>
    %11 = math.exp %10 : vector<8x64xf32>
    %12 = math.log1p %11 : vector<8x64xf32>
    %13 = arith.addf %7, %12 : vector<8x64xf32>
    %c0_7 = arith.constant 0 : index
    %c0_8 = arith.constant 0 : index
    %14 = vector.load %arg4[%c0_7, %c0_8] : memref<64x128xf32, #tpu.memory_space<vmem>>, vector<64x128xf32>
    %cst_9 = arith.constant dense<0.000000e+00> : vector<8x128xf32>
    %15 = tpu.matmul %13, %14, %cst_9 {dimension_numbers = #tpu.dot_dimension_numbers<[1], [0], [0], [1], [0, 0, 1, 1], [], []>} : vector<8x64xf32>, vector<64x128xf32>, vector<8x128xf32> -> vector<8x128xf32>
    %c0_10 = arith.constant 0 : index
    %c0_11 = arith.constant 0 : index
    %16 = vector.load %arg5[%c0_10, %c0_11] : memref<1x128xf32, #tpu.memory_space<vmem>>, vector<1x128xf32>
    %17 = vector.broadcast %16 : vector<1x128xf32> to vector<8x128xf32>
    %18 = arith.addf %15, %17 : vector<8x128xf32>
    %cst_12 = arith.constant dense<0xFF800000> : vector<8xf32>
    %19 = vector.multi_reduction <maximumf>, %18, %cst_12 [1] : vector<8x128xf32> to vector<8xf32>
    %20 = vector.shape_cast %19 : vector<8xf32> to vector<8x1xf32>
    %21 = vector.broadcast %20 : vector<8x1xf32> to vector<8x128xf32>
    %22 = arith.subf %18, %21 : vector<8x128xf32>
    %23 = math.exp %22 : vector<8x128xf32>
    %cst_13 = arith.constant dense<0.000000e+00> : vector<8xf32>
    %24 = vector.multi_reduction <add>, %23, %cst_13 [1] : vector<8x128xf32> to vector<8xf32>
    %25 = vector.shape_cast %24 : vector<8xf32> to vector<8x1xf32>
    %26 = tpu.reciprocal %25 : vector<8x1xf32> -> vector<8x1xf32>
    %27 = vector.broadcast %26 : vector<8x1xf32> to vector<8x128xf32>
    %28 = arith.mulf %23, %27 : vector<8x128xf32>
    %c0_14 = arith.constant 0 : index
    %c0_15 = arith.constant 0 : index
    %29 = vector.load %arg6[%c0_14, %c0_15] : memref<8x128xf32, #tpu.memory_space<vmem>>, vector<8x128xf32>
    tpu.vector_store %arg6[%c0_14, %c0_15], %28 {strides = array<i32>} : memref<8x128xf32, #tpu.memory_space<vmem>>, vector<8x128xf32>,
    return
  }
  func.func @transform_0(%arg0: i32) -> (i32, i32) {
    %c0_i32 = arith.constant 0 : i32
    %c0_i32_0 = arith.constant 0 : i32
    return %arg0, %c0_i32 : i32, i32
  }
  func.func @transform_1(%arg0: i32) -> (i32, i32) {
    %c0_i32 = arith.constant 0 : i32
    %c0_i32_0 = arith.constant 0 : i32
    %c0_i32_1 = arith.constant 0 : i32
    return %c0_i32, %c0_i32_0 : i32, i32
  }
  func.func @transform_2(%arg0: i32) -> (i32, i32) {
    %c0_i32 = arith.constant 0 : i32
    %c0_i32_0 = arith.constant 0 : i32
    %c0_i32_1 = arith.constant 0 : i32
    return %c0_i32, %c0_i32_0 : i32, i32
  }
  func.func @transform_3(%arg0: i32) -> (i32, i32) {
    %c0_i32 = arith.constant 0 : i32
    %c0_i32_0 = arith.constant 0 : i32
    %c0_i32_1 = arith.constant 0 : i32
    return %c0_i32, %c0_i32_0 : i32, i32
  }
  func.func @transform_4(%arg0: i32) -> (i32, i32) {
    %c0_i32 = arith.constant 0 : i32
    %c0_i32_0 = arith.constant 0 : i32
    %c0_i32_1 = arith.constant 0 : i32
    return %c0_i32, %c0_i32_0 : i32, i32
  }
  func.func @transform_5(%arg0: i32) -> (i32, i32) {
    %c0_i32 = arith.constant 0 : i32
    %c0_i32_0 = arith.constant 0 : i32
    return %arg0, %c0_i32 : i32, i32
  }
}

</mosaic_0001>

<llo_original>
// kernel: tpu_custom_call.1
$region0: #{tpu_custom_call.1}
  #allocation0 [shape = 'u32[]', space=smem, size = 0x4, offset = 0x4, fixed_abs, tag = 'smem constant byte address 0x4 - core index']
  #allocation1 [shape = 'u32[72,128]{1,0:T(1,128)}', space=vmem, size = 0x9000, scoped, tag = 'internal scratch']
  %s0 = inlined_call_operand.hbm [shape: f32[8,32], index: 0, kind: input, shape index: {}]
  %s1 = inlined_call_operand.hbm [shape: f32[32,64], index: 1, kind: input, shape index: {}]
  %s2 = inlined_call_operand.vmem [shape: f32[1,64], index: 2, kind: input, shape index: {}]
  %s3 = inlined_call_operand.hbm [shape: f32[64,128], index: 3, kind: input, shape index: {}]
  %s4 = inlined_call_operand.vmem [shape: f32[1,128], index: 4, kind: input, shape index: {}]
  %s5 = inlined_call_operand.hbm [shape: f32[8,128], index: 5, kind: output, shape index: {}]
  %s6 = sld [smem:[#allocation0]]
  $region42: #{tpu_custom_call.1} parent=0
    _
  %s8 = ssub.s32 1, %s6
  %s9 = scalar_select 0, %s8, %s6
  $region1: #{tpu_custom_call.1} parent=0
    #allocation2 [shape = 'u8[4096]{0}', space=vmem, size = 0x1000, scoped, tag = 'input window, operand 0, single buffered']
    #allocation3 [shape = 's32[1]{0}', space=sflag, size = 0x4, scoped, tag = 'scoped memory for tpu_custom_call.1']
    #allocation4 [shape = 's32[1]{0}', space=sflag, size = 0x4, scoped, tag = 'scoped memory for tpu_custom_call.1']
    #allocation5 [shape = 'u8[16384]{0}', space=vmem, size = 0x4000, scoped, tag = 'input window, operand 1, single buffered']
    #allocation6 [shape = 's32[1]{0}', space=sflag, size = 0x4, scoped, tag = 'scoped memory for tpu_custom_call.1']
    #allocation7 [shape = 'u8[32768]{0}', space=vmem, size = 0x8000, scoped, tag = 'input window, operand 3, single buffered']
    #allocation8 [shape = 'u8[4096]{0}', space=vmem, size = 0x1000, scoped, tag = 'output window, operand 0, single buffered']
    %10 = vsyncpa [#allocation3], 0
    %11 = vsyncpa [#allocation6], 0
    %12 = vsyncpa [#allocation4], 0
    // Predicated region
    $region2: #{tpu_custom_call.1} parent=1 // pred_check
      _
    $region3: #{tpu_custom_call.1} parent=1 // pred_check_branch
      %14 = sbr.rel (0) target = $region5
    $region4: #{tpu_custom_call.1} parent=1 // pred_region
      %16 = vsyncadd [#allocation3], 0
      %s18 = sshll.u32 %s0, 4
      %s19 = int_to_ptr.hbm [resolvable:$true] %s18
      %s20 = sshll.u32 [#allocation2], 4
      %s21 = int_to_ptr.vmem [resolvable:$true] %s20
      %23 = dma.hbm_to_vmem [thread:$0]  %s19, 128, %s21, [#allocation3]
    $region5: #{tpu_custom_call.1} parent=1 // pred_fallthru
      _
    // Predicated region
    $region6: #{tpu_custom_call.1} parent=1 // pred_check
      _
    $region7: #{tpu_custom_call.1} parent=1 // pred_check_branch
      %25 = sbr.rel (0) target = $region9
    $region8: #{tpu_custom_call.1} parent=1 // pred_region
      %27 = vsyncadd [#allocation6], 0
      %s28 = sshll.u32 %s1, 4
      %s29 = int_to_ptr.hbm [resolvable:$true] %s28
      %s30 = sshll.u32 [#allocation5], 4
      %s31 = int_to_ptr.vmem [resolvable:$true] %s30
      %36 = dma.hbm_to_vmem [thread:$0]  %s29, 512, %s31, [#allocation6], 128, 128, 8
    $region9: #{tpu_custom_call.1} parent=1 // pred_fallthru
      _
    // Predicated region
    $region10: #{tpu_custom_call.1} parent=1 // pred_check
      _
    $region11: #{tpu_custom_call.1} parent=1 // pred_check_branch
      %38 = sbr.rel (0) target = $region13
    $region12: #{tpu_custom_call.1} parent=1 // pred_region
      _
    $region13: #{tpu_custom_call.1} parent=1 // pred_fallthru
      _
    // Predicated region
    $region14: #{tpu_custom_call.1} parent=1 // pred_check
      _
    $region15: #{tpu_custom_call.1} parent=1 // pred_check_branch
      %40 = sbr.rel (0) target = $region17
    $region16: #{tpu_custom_call.1} parent=1 // pred_region
      %42 = vsyncadd [#allocation6], 0
      %s43 = sshll.u32 %s3, 4
      %s44 = int_to_ptr.hbm [resolvable:$true] %s43
      %s45 = sshll.u32 [#allocation7], 4
      %s46 = int_to_ptr.vmem [resolvable:$true] %s45
      %51 = dma.hbm_to_vmem [thread:$0]  %s44, 1024, %s46, [#allocation6], 128, 128, 8
    $region17: #{tpu_custom_call.1} parent=1 // pred_fallthru
      _
    // Predicated region
    $region18: #{tpu_custom_call.1} parent=1 // pred_check
      _
    $region19: #{tpu_custom_call.1} parent=1 // pred_check_branch
      %53 = sbr.rel (0) target = $region21
    $region20: #{tpu_custom_call.1} parent=1 // pred_region
      _
    $region21: #{tpu_custom_call.1} parent=1 // pred_fallthru
      _
    // Predicated region
    $region22: #{tpu_custom_call.1} parent=1 // pred_check
      _
    $region23: #{tpu_custom_call.1} parent=1 // pred_check_branch
      %55 = sbr.rel (0) target = $region25
    $region24: #{tpu_custom_call.1} parent=1 // pred_region
      %57 = dma.done [#allocation3], 128
    $region25: #{tpu_custom_call.1} parent=1 // pred_fallthru
      _
    // Predicated region
    $region26: #{tpu_custom_call.1} parent=1 // pred_check
      _
    $region27: #{tpu_custom_call.1} parent=1 // pred_check_branch
      %59 = sbr.rel (0) target = $region29
    $region28: #{tpu_custom_call.1} parent=1 // pred_region
      %61 = dma.done [#allocation6], 512
    $region29: #{tpu_custom_call.1} parent=1 // pred_fallthru
      _
    // Predicated region
    $region30: #{tpu_custom_call.1} parent=1 // pred_check
      _
    $region31: #{tpu_custom_call.1} parent=1 // pred_check_branch
      %63 = sbr.rel (0) target = $region33
    $region32: #{tpu_custom_call.1} parent=1 // pred_region
      %65 = dma.done [#allocation6], 1024
    $region33: #{tpu_custom_call.1} parent=1 // pred_fallthru
      _
    %v66 = vld [vmem:[#allocation2] sm:$0xff]
    %v67 = vld [vmem:[#allocation5] sm:$0xff]
    %v68 = vld [vmem:[#allocation5 + $0x8] sm:$0xff]
    %v69 = vld [vmem:[#allocation5 + $0x10] sm:$0xff]
    %v70 = vld [vmem:[#allocation5 + $0x18] sm:$0xff]
    %v71 = vld [vmem:[%s2] sm:$0x1]
    %v73 = vperm.slane %v71, 0
    %vm75 = vcmask 261120
    %v77 = vsel %vm75, %v66, 0
    %79 = vmatpush.msra.mxu0 0.0
    %80 = vmatpush.msra.mxu0 0.0
    %81 = vmatpush.msra.mxu0 0.0
    %82 = vmatpush.msra.mxu0 0.0
    %83 = vmatpush.msra.mxu0 0.0
    %84 = vmatpush.msra.mxu0 0.0
    %85 = vmatpush.msra.mxu0 0.0
    %86 = vmatpush.msra.mxu0 0.0
    %87 = vmatpush.msra.mxu0 0.0
    %88 = vmatpush.msra.mxu0 0.0
    %89 = vmatpush.msra.mxu0 0.0
    %90 = vmatpush.msra.mxu0 0.0
    %91 = vmatpush.msra.mxu0 %v70
    %92 = vmatpush.msra.mxu0 %v69
    %93 = vmatpush.msra.mxu0 %v68
    %94 = vmatpush.msra.mxu0 %v67
    %95 = vmatmul.f32.gmra.mxu0 %v77
    %v96 = vpop.f32.mrf.mxu0
    %v97 = vadd.f32 %v73, %v96
    %98 = vdwg.mxu0
    %v99 = vmax.f32 %v97, 0.0
    %v100 = vand.u32 2147483647, %v97
    %v101 = vsub.f32 0.0, %v100
    %v102 = vmul.f32 %v101, 1.442695
    %v103 = vpow.pop %v102
    %v104 = vadd.f32 %v103, 1.0
    %v105 = vlog2.pop %v104
    %v106 = vmul.f32 %v105, 0.6931472
    %v107 = vmul.f32 -0.5, %v103
    %v108 = vadd.f32 %v107, 1.0
    %v109 = vmul.f32 %v108, %v103
    %v110 = vand.u32 2147483647, %v103
    %vm111 = vcmp.lt.f32.partialorder %v110, 0.0004427343
    %v112 = vsel %vm111, %v109, %v106
    %v113 = vadd.f32 %v99, %v112
    %v114 = vld [vmem:[#allocation7] sm:$0xff]
    %v115 = vld [vmem:[#allocation7 + $0x8] sm:$0xff]
    %v116 = vld [vmem:[#allocation7 + $0x10] sm:$0xff]
    %v117 = vld [vmem:[#allocation7 + $0x18] sm:$0xff]
    %v118 = vld [vmem:[#allocation7 + $0x20] sm:$0xff]
    %v119 = vld [vmem:[#allocation7 + $0x28] sm:$0xff]
    %v120 = vld [vmem:[#allocation7 + $0x30] sm:$0xff]
    %v121 = vld [vmem:[#allocation7 + $0x38] sm:$0xff]
    %v122 = vld [vmem:[%s4] sm:$0x1]
    %v124 = vperm.slane %v122, 0
    %vm126 = vcmask 523264
    %v128 = vsel %vm126, %v113, 0
    %130 = vmatpush.msra.mxu0 0.0
    %131 = vmatpush.msra.mxu0 0.0
    %132 = vmatpush.msra.mxu0 0.0
    %133 = vmatpush.msra.mxu0 0.0
    %134 = vmatpush.msra.mxu0 0.0
    %135 = vmatpush.msra.mxu0 0.0
    %136 = vmatpush.msra.mxu0 0.0
    %137 = vmatpush.msra.mxu0 0.0
    %138 = vmatpush.msra.mxu0 %v121
    %139 = vmatpush.msra.mxu0 %v120
    %140 = vmatpush.msra.mxu0 %v119
    %141 = vmatpush.msra.mxu0 %v118
    %142 = vmatpush.msra.mxu0 %v117
    %143 = vmatpush.msra.mxu0 %v116
    %144 = vmatpush.msra.mxu0 %v115
    %145 = vmatpush.msra.mxu0 %v114
    %146 = vmatmul.f32.gmra.mxu0 %v128
    %v147 = vpop.f32.mrf.mxu0
    %v148 = vadd.f32 %v124, %v147
    %149 = vdwg.mxu0
    %150 = vmax.xlane.f32.xlu0 %v148
    %v151 = vpop.xlane.xlu0 %150
    %v152 = vsub.f32 %v148, %v151
    %v153 = vmul.f32 %v152, 1.442695
    %v154 = vpow.pop %v153
    %155 = vadd.xlane.f32.xlu0 %v154
    %v156 = vpop.xlane.xlu0 %155
    %v157 = vrcp.pop %v156
    %v158 = vmul.f32 %v156, %v157
    %v159 = vsub.f32 1.0, %v158
    %v160 = vmul.f32 %v157, %v159
    %v161 = vadd.f32 %v157, %v160
    %vm162 = vweird.f32 %v156
    %vm163 = vweird.f32 %v157
    %vm164 = vmor %vm162, %vm163
    %v165 = vsel %vm164, %v157, %v161
    %v166 = vand.u32 2147483647, %v156
    %vm167 = vcmp.eq.f32.partialorder %v166, 8.507059e+37
    %v168 = vand.u32 %v156, 2147483648
    %v169 = vor.u32 1.1754944e-38, %v168
    %v170 = vsel %vm167, %v169, %v165
    %v171 = vmul.f32 %v154, %v170
    %172 = vst [vmem:[#allocation8] sm:$0xff] %v171
    // Predicated region
    $region34: #{tpu_custom_call.1} parent=1 // pred_check
      _
    $region35: #{tpu_custom_call.1} parent=1 // pred_check_branch
      %174 = sbr.rel (0) target = $region37
    $region36: #{tpu_custom_call.1} parent=1 // pred_region
      %176 = vsyncadd [#allocation4], 0
      %s178 = sshll.u32 [#allocation8], 4
      %s179 = int_to_ptr.vmem [resolvable:$true] %s178
      %s180 = sshll.u32 %s5, 4
      %s181 = int_to_ptr.hbm [resolvable:$true] %s180
      %183 = dma.vmem_to_hbm [thread:$0]  %s179, 128, %s181, [#allocation4]
    $region37: #{tpu_custom_call.1} parent=1 // pred_fallthru
      _
    // Predicated region
    $region38: #{tpu_custom_call.1} parent=1 // pred_check
      _
    $region39: #{tpu_custom_call.1} parent=1 // pred_check_branch
      %185 = sbr.rel (0) target = $region41
    $region40: #{tpu_custom_call.1} parent=1 // pred_region
      %187 = dma.done [#allocation4], 128
    $region41: #{tpu_custom_call.1} parent=1 // pred_fallthru
      _
    %188 = vsyncpa [#allocation3], 1
    %189 = vsyncpa [#allocation6], 1
    %190 = vsyncpa [#allocation4], 1

</llo_original>
